<compile_context>
chip_gen: v7x
topology: tpu7x:2x2x1
jax: 0.10.0
libtpu: 0.0.40
codegen_flags: <defaults>
</compile_context>

<pallas_src>
import math

import jax
import jax.numpy as jnp
from jax.experimental import pallas as pl
from jax.experimental.pallas import tpu as pltpu


# Only split the DMA into chunks if each chunk moves at least this many bytes.
_MIN_CHUNK_BYTES = 1 * 1024 * 1024


def _resolve_view_shape(total_elems, shape):
    """Resolve a single -1 dimension, PyTorch .view() style."""
    shape = list(shape)
    if -1 in shape:
        idx = shape.index(-1)
        known = 1
        for i, s in enumerate(shape):
            if i != idx:
                known *= s
        if known == 0:
            raise ValueError("cannot infer -1 dimension with a zero-sized dim")
        assert total_elems % known == 0, "view shape incompatible with input size"
        shape[idx] = total_elems // known
    assert math.prod(shape) == total_elems, "view shape incompatible with input size"
    return tuple(shape)


def _pick_chunks(out_shape, itemsize, total):
    """Choose how many leading-dim chunks to split the HBM->HBM DMA into."""
    if len(out_shape) == 0:
        return 1, 0
    dim0 = out_shape[0]
    bytes_total = total * itemsize
    for n in (4, 2):
        if dim0 >= n and dim0 % n == 0 and (bytes_total // n) >= _MIN_CHUNK_BYTES:
            return n, dim0 // n
    return 1, dim0


def _make_copy_kernel(n_chunks, chunk_rows):
    """Kernel: one (or a few) direct HBM->HBM async copies of the whole array."""
    if n_chunks == 1:
        def kernel(x_hbm, o_hbm, sem):
            cp = pltpu.make_async_copy(x_hbm, o_hbm, sem)
            cp.start()
            cp.wait()
        return kernel

    def kernel(x_hbm, o_hbm, sem):
        copies = [
            pltpu.make_async_copy(
                x_hbm.at[pl.ds(c * chunk_rows, chunk_rows)],
                o_hbm.at[pl.ds(c * chunk_rows, chunk_rows)],
                sem.at[c],
            )
            for c in range(n_chunks)
        ]
        for cp in copies:          # issue all DMAs (multiple engines)
            cp.start()
        for cp in copies:          # then wait for all of them
            cp.wait()
    return kernel


def pallas_view(x, *shape):
    """Equivalent of `View(*shape)(x)` = x.view(*shape); the data copy is a
    direct HBM->HBM DMA inside a Pallas TPU kernel."""
    total = int(x.size)
    out_shape = _resolve_view_shape(total, shape)
    dtype = x.dtype
    itemsize = jnp.dtype(dtype).itemsize

    # Metadata-level reshape to the target view shape (bitcast when possible).
    x_view = x.reshape(out_shape)

    # Zero-sized tensors: nothing to copy.
    if total == 0:
        return x_view

    n_chunks, chunk_rows = _pick_chunks(out_shape, itemsize, total)

    if n_chunks == 1:
        sem_shape = pltpu.SemaphoreType.DMA(())
    else:
        sem_shape = pltpu.SemaphoreType.DMA((n_chunks,))

    out = pl.pallas_call(
        _make_copy_kernel(n_chunks, chunk_rows),
        out_shape=jax.ShapeDtypeStruct(out_shape, dtype),
        in_specs=[pl.BlockSpec(memory_space=pl.ANY)],
        out_specs=pl.BlockSpec(memory_space=pl.ANY),
        scratch_shapes=[sem_shape],
        cost_estimate=pl.CostEstimate(
            flops=0,
            transcendentals=0,
            bytes_accessed=2 * total * itemsize,
        ),
    )(x_view)
    return out


if __name__ == "__main__":
    k0, k1, k2, k3 = jax.random.split(jax.random.PRNGKey(0), 4)

    # Primary case, consistent with typical use of View in the model
    # (flattening conv features before a linear layer): (2, 4, 16, 16) -> (2, -1).
    x = jax.random.normal(k0, (2, 4, 16, 16), dtype=jnp.float32)
    out = jax.block_until_ready(pallas_view(x, 2, -1))
    ref = x.reshape(2, -1)
    assert out.shape == ref.shape and out.dtype == ref.dtype
    assert bool(jnp.array_equal(out, ref))

    # Larger flat view (exercises the 2-chunk multi-DMA path).
    y = jax.random.normal(k1, (600, 1024), dtype=jnp.float32)
    out_y = jax.block_until_ready(pallas_view(y, -1))
    assert bool(jnp.array_equal(out_y, y.reshape(-1)))

    # 4-chunk path.
    w = jax.random.normal(k2, (8, 128, 1024), dtype=jnp.float32)
    out_w = jax.block_until_ready(pallas_view(w, 1024, 1024))
    assert bool(jnp.array_equal(out_w, w.reshape(1024, 1024)))

    # Awkward size not divisible by 128 (no padding round-trip anymore).
    z = jax.random.normal(k3, (2, 3, 5, 7), dtype=jnp.float32)
    out_z = jax.block_until_ready(pallas_view(z, 6, 35))
    assert bool(jnp.array_equal(out_z, z.reshape(6, 35)))

    # Sub-32-bit dtype.
    xb = x.astype(jnp.bfloat16)
    out_b = jax.block_until_ready(pallas_view(xb, 8, 256))
    assert out_b.dtype == jnp.bfloat16
    assert bool(jnp.array_equal(out_b, xb.reshape(8, 256)))

    print("KERNEL_OK")
</pallas_src>

<mosaic_0001>
module attributes {stable_mosaic.version = 11 : i64} {
  func.func @kernel(%arg0: memref<2x1024xf32, #tpu.memory_space<any>>, %arg1: memref<2x1024xf32, #tpu.memory_space<any>>, %arg2: memref<!tpu.dma_semaphore, #tpu.memory_space<semaphore_mem>>) attributes {dimension_semantics = [], scalar_prefetch = 0 : i64, scratch_operands = 1 : i64, tpu.core_type = #tpu.core_type<tc>} {
    tpu.enqueue_dma source(%arg0 : memref<2x1024xf32, #tpu.memory_space<any>>) target(%arg1 : memref<2x1024xf32, #tpu.memory_space<any>>) target_semaphore(%arg2 : memref<!tpu.dma_semaphore, #tpu.memory_space<semaphore_mem>>)
    tpu.wait_dma2 semaphore(%arg2 : memref<!tpu.dma_semaphore, #tpu.memory_space<semaphore_mem>>) src(%arg0 : memref<2x1024xf32, #tpu.memory_space<any>>) dst(%arg1 : memref<2x1024xf32, #tpu.memory_space<any>>)
    return
  }
}

</mosaic_0001>

<llo_original>
// kernel: tpu_custom_call.1
$region0: #{tpu_custom_call.1}
  #allocation0 [shape = 'u32[]', space=smem, size = 0x4, offset = 0x4, fixed_abs, tag = 'smem constant byte address 0x4 - core index']
  #allocation1 [shape = 'u32[144,128]{1,0:T(1,128)}', space=vmem, size = 0x12000, scoped, tag = 'internal scratch']
  #allocation2 [shape = 's32[1]{0}', space=sflag, size = 0x4, scoped, tag = 'scratch operand']
  #allocation3 [shape = 's32[]', space=sflag, size = 0x4, offset = 0, fixed_abs, tag = 'sflag constant byte address 0x0 - dummy sync flag']
  #allocation4 [shape = 'u32[0]{0}', space=smem, size = 0, offset = 0, fixed_abs, tag = 'smem constant byte address 0x0 - null']
  %s0 = inlined_call_operand.hbm [shape: f32[2,1024], index: 0, kind: input, shape index: {}]
  %s1 = inlined_call_operand.hbm [shape: f32[2,1024], index: 1, kind: output, shape index: {}]
  %s2 = sld [smem:[#allocation0]]
  $region2: #{tpu_custom_call.1} parent=0
    _
  %s4 = ssub.s32 1, %s2
  %s5 = scalar_select 0, %s4, %s2
  %s7 = sshll.u32 1, 14
  %s8 = sxor.u32 4294967295, %s7
  %s11 = sshll.u32 3, 24
  %s12 = sxor.u32 4294967295, %s11
  %s13 = sand.u32 0, %s12
  %s15 = sor.u32 %s13, 0
  %18 = dma.general %s0, 256, %s1, [#allocation2], [#allocation3], [#allocation4], %s15, 0
  %s19 = smul.u32 2, 1
  %s20 = smul.u32 %s19, 8
  %s21 = sshll.u32 %s20, 4
  %22 = dma.done [#allocation2], %s21
  %23 = vsyncmov [#allocation2]
  %s24 = vpop.sfrf %23
  %p25 = scmp.eq.s32.totalorder %s24, 0
  %p26 = pneg %p25
  %28 = shalt.err (%p26)

</llo_original>
